<compile_context>
chip_gen: v6e
topology: v6e:2x2x1
jax: 0.10.0
libtpu: 0.0.40
codegen_flags: <defaults>
</compile_context>

<pallas_src>
import jax
import jax.numpy as jnp
from jax.experimental import pallas as pl
from jax.experimental.pallas import tpu as pltpu

_LANE = 128
_MAX_BLOCK_BYTES = 4 * 1024 * 1024       # ~4 MiB per block (amortizes grid-step overhead)
_VMEM_LIMIT_BYTES = 32 * 1024 * 1024     # explicit scoped-VMEM budget, safe on v5e/v6e/v7x


# ---------------------------------------------------------------------------
# Forward: identity via one HBM->HBM DMA (no VMEM round-trip)
# ---------------------------------------------------------------------------
def _identity_dma_kernel(x_hbm_ref, o_hbm_ref, dma_sem):
    cp = pltpu.make_async_copy(x_hbm_ref, o_hbm_ref, dma_sem)
    cp.start()
    cp.wait()


def _identity_forward(x):
    if x.size == 0:
        return x
    itemsize = jnp.dtype(x.dtype).itemsize
    return pl.pallas_call(
        _identity_dma_kernel,
        out_shape=jax.ShapeDtypeStruct(x.shape, x.dtype),
        in_specs=[pl.BlockSpec(memory_space=pl.ANY)],
        out_specs=pl.BlockSpec(memory_space=pl.ANY),
        scratch_shapes=[pltpu.SemaphoreType.DMA(())],
        cost_estimate=pl.CostEstimate(
            flops=0, transcendentals=0, bytes_accessed=2 * x.size * itemsize),
    )(x)


# ---------------------------------------------------------------------------
# Backward: grad_in = -coeff * grad_out  (coeff is a runtime SMEM scalar)
# ---------------------------------------------------------------------------
def _neg_scale_kernel(coeff_ref, g_ref, o_ref):
    c = coeff_ref[0]                                    # f32 scalar from SMEM
    o_ref[...] = (g_ref[...] * (-c)).astype(o_ref.dtype)  # mul in f32, cast back


def _sublane_multiple(dtype):
    """Packed second-minor tile multiple: 8 (>=4B), 16 (bf16), 32 (int8)."""
    itemsize = jnp.dtype(dtype).itemsize
    if itemsize >= 4:
        return 8
    return 8 * (4 // itemsize)


def _neg_scale_2d(g2d, coeff_arr):
    """Lane-dense (rows, lane) tiled path for numel % 128 == 0."""
    rows, lane = g2d.shape
    itemsize = jnp.dtype(g2d.dtype).itemsize
    sub = _sublane_multiple(g2d.dtype)

    tm = max(sub, (_MAX_BLOCK_BYTES // (lane * itemsize)) // sub * sub)
    # Keep >= 2 grid steps on big tensors so v7x's two TensorCores both stream.
    if rows > 2 * sub:
        tm = min(tm, max(sub, (rows // 2) // sub * sub))
    if tm >= rows:
        tm = rows                                       # full dim is always legal
    grid = (pl.cdiv(rows, tm),)

    return pl.pallas_call(
        _neg_scale_kernel,
        out_shape=jax.ShapeDtypeStruct((rows, lane), g2d.dtype),
        grid=grid,
        in_specs=[
            pl.BlockSpec(memory_space=pltpu.MemorySpace.SMEM),   # coeff scalar
            pl.BlockSpec((tm, lane), lambda i: (i, 0)),
        ],
        out_specs=pl.BlockSpec((tm, lane), lambda i: (i, 0)),
        input_output_aliases={1: 0},                     # grad_out is dead: write in place
        compiler_params=pltpu.CompilerParams(
            dimension_semantics=("parallel",),
            vmem_limit_bytes=_VMEM_LIMIT_BYTES,
        ),
        cost_estimate=pl.CostEstimate(
            flops=rows * lane, transcendentals=0,
            bytes_accessed=2 * rows * lane * itemsize),
    )(coeff_arr, g2d)


def _neg_scale_1d(gflat, coeff_arr):
    """Ragged path (numel % 128 != 0): 1-D blocks, tail masked in-kernel by Pallas."""
    (n,) = gflat.shape
    itemsize = jnp.dtype(gflat.dtype).itemsize
    bn = max(1024, (_MAX_BLOCK_BYTES // itemsize) // 1024 * 1024)  # multiple of 8*128
    if bn >= n:
        bn = n                                           # full-array block is always legal
    grid = (pl.cdiv(n, bn),)

    return pl.pallas_call(
        _neg_scale_kernel,
        out_shape=jax.ShapeDtypeStruct((n,), gflat.dtype),
        grid=grid,
        in_specs=[
            pl.BlockSpec(memory_space=pltpu.MemorySpace.SMEM),
            pl.BlockSpec((bn,), lambda i: (i,)),
        ],
        out_specs=pl.BlockSpec((bn,), lambda i: (i,)),
        input_output_aliases={1: 0},
        compiler_params=pltpu.CompilerParams(
            dimension_semantics=("parallel",),
            vmem_limit_bytes=_VMEM_LIMIT_BYTES,
        ),
        cost_estimate=pl.CostEstimate(
            flops=n, transcendentals=0, bytes_accessed=2 * n * itemsize),
    )(coeff_arr, gflat)


def _neg_scale(g, coeff):
    if g.size == 0:
        return g
    orig_shape = g.shape
    n = g.size
    coeff_arr = jnp.reshape(coeff.astype(jnp.float32), (1,))
    if n % _LANE == 0:
        # Prefer a wide minor dim (full-width vst instead of masked stores).
        lane = _LANE
        for cand in (4096, 2048, 1024, 512, 256):
            if n % cand == 0:
                lane = cand
                break
        out = _neg_scale_2d(g.reshape(n // lane, lane), coeff_arr)
    else:
        out = _neg_scale_1d(g.reshape(-1), coeff_arr)
    return out.reshape(orig_shape)


# ---------------------------------------------------------------------------
# custom_vjp wrapper (coeff is a traced runtime scalar -> no recompiles)
# ---------------------------------------------------------------------------
@jax.custom_vjp
def _grl(x, coeff):
    return _identity_forward(x)


def _grl_fwd(x, coeff):
    return _identity_forward(x), coeff


def _grl_bwd(coeff, g):
    return _neg_scale(g, coeff), jnp.zeros_like(coeff)


_grl.defvjp(_grl_fwd, _grl_bwd)


def gradient_reverse_layer(x, coeff=1.0):
    """GradientReverseLayer: forward identity, backward grad_in = -coeff * grad_out."""
    coeff = jnp.asarray(coeff, dtype=jnp.float32)
    return _grl(x, coeff)


# ---------------------------------------------------------------------------
# Self-test
# ---------------------------------------------------------------------------
if __name__ == "__main__":
    key = jax.random.PRNGKey(0)
    # NCHW input, like the PyTorch module's typical use.
    x = jax.random.normal(key, (2, 4, 16, 16), dtype=jnp.float32)

    # Forward pass (Pallas HBM->HBM DMA identity).
    fwd = jax.jit(gradient_reverse_layer)
    y = jax.block_until_ready(fwd(x, 1.0))
    assert y.shape == x.shape and y.dtype == x.dtype
    assert bool(jnp.allclose(y, x)), "forward is not identity"

    # Backward pass: coeff is traced, so one compilation serves every coeff value.
    grad_fn = jax.jit(
        jax.grad(lambda a, c: jnp.sum(gradient_reverse_layer(a, c)), argnums=0))
    g1 = jax.block_until_ready(grad_fn(x, 0.5))
    g2 = jax.block_until_ready(grad_fn(x, 2.0))
    assert bool(jnp.allclose(g1, -0.5 * jnp.ones_like(x))), "backward (coeff=0.5) wrong"
    assert bool(jnp.allclose(g2, -2.0 * jnp.ones_like(x))), "backward (coeff=2.0) wrong"

    # Ragged shape (numel % 128 != 0) exercises the masked 1-D path (no jnp.pad).
    xr = jax.random.normal(key, (3, 5, 7), dtype=jnp.float32)
    yr = jax.block_until_ready(fwd(xr, 1.0))
    assert bool(jnp.allclose(yr, xr)), "ragged forward is not identity"
    gr = jax.block_until_ready(grad_fn(xr, 1.5))
    assert bool(jnp.allclose(gr, -1.5 * jnp.ones_like(xr))), "ragged backward wrong"

    print("KERNEL_OK")
</pallas_src>

<mosaic_0001>
module attributes {stable_mosaic.version = 11 : i64} {
  func.func @_identity_dma_kernel(%arg0: memref<2x4x16x16xf32, #tpu.memory_space<any>>, %arg1: memref<2x4x16x16xf32, #tpu.memory_space<any>>, %arg2: memref<!tpu.dma_semaphore, #tpu.memory_space<semaphore_mem>>) attributes {dimension_semantics = [], scalar_prefetch = 0 : i64, scratch_operands = 1 : i64, tpu.core_type = #tpu.core_type<tc>} {
    tpu.enqueue_dma source(%arg0 : memref<2x4x16x16xf32, #tpu.memory_space<any>>) target(%arg1 : memref<2x4x16x16xf32, #tpu.memory_space<any>>) target_semaphore(%arg2 : memref<!tpu.dma_semaphore, #tpu.memory_space<semaphore_mem>>)
    tpu.wait_dma2 semaphore(%arg2 : memref<!tpu.dma_semaphore, #tpu.memory_space<semaphore_mem>>) src(%arg0 : memref<2x4x16x16xf32, #tpu.memory_space<any>>) dst(%arg1 : memref<2x4x16x16xf32, #tpu.memory_space<any>>)
    return
  }
}

</mosaic_0001>

<llo_original>
// kernel: gradient_reverse_layer.1
$region0: #{gradient_reverse_layer.1}
  #allocation0 [shape = 'u32[]', space=smem, size = 0x4, offset = 0x4, fixed_abs, tag = 'smem constant byte address 0x4 - core index']
  #allocation1 [shape = 'u32[144,128]{1,0:T(1,128)}', space=vmem, size = 0x12000, scoped, tag = 'internal scratch']
  #allocation2 [shape = 's32[1]{0}', space=sflag, size = 0x4, scoped, tag = 'scratch operand']
  #allocation3 [shape = 's32[]', space=sflag, size = 0x4, offset = 0, fixed_abs, tag = 'sflag constant byte address 0x0 - dummy sync flag']
  #allocation4 [shape = 'u32[0]{0}', space=smem, size = 0, offset = 0, fixed_abs, tag = 'smem constant byte address 0x0 - null']
  %s0 = inlined_call_operand.hbm [shape: f32[2,4,16,16], index: 0, kind: input, shape index: {}]
  %s1 = inlined_call_operand.hbm [shape: f32[2,4,16,16], index: 1, kind: output, shape index: {}]
  %s2 = sld [smem:[#allocation0]]
  $region2: #{gradient_reverse_layer.1} parent=0
    _
  %s4 = ssub.s32 1, %s2
  %s5 = scalar_select 0, %s4, %s2
  %s7 = sshll.u32 1, 14
  %s8 = sxor.u32 4294967295, %s7
  %12 = dma.general %s0, 2048, %s1, [#allocation2], 131072, [#allocation4], 0, 0
  %s13 = smul.u32 2, 4
  %s14 = smul.u32 %s13, 16
  %s15 = smul.u32 %s14, 1
  %s16 = sshll.u32 %s15, 4
  %17 = dma.done [#allocation2], %s16
  %18 = vsyncmov [#allocation2]
  %s19 = vpop.sfrf %18
  %p20 = scmp.eq.s32.totalorder %s19, 0
  %p21 = pneg %p20
  %23 = shalt.err (%p21)

</llo_original>
